<compile_context>
chip_gen: v5e
topology: v5e:2x2
jax: 0.10.0
libtpu: 0.0.40
codegen_flags: <defaults>
</compile_context>

<pallas_src>
import jax
import jax.numpy as jnp
from jax.experimental import pallas as pl
from jax.experimental.pallas import tpu as pltpu


def _fusion_embed_kernel(xa_ref, xb_ref, wa_ref, wb_ref, o_ref):
    # xa_ref, xb_ref : (C, T)      lane-dense spatial tiles of each stream
    # wa_ref, wb_ref : (C_out, C)  small weight slabs, resident in VMEM
    # o_ref          : (C_out, T)  lane-dense output tile
    acc = jnp.dot(wa_ref[...], xa_ref[...], preferred_element_type=jnp.float32)
    acc = acc + jnp.dot(wb_ref[...], xb_ref[...], preferred_element_type=jnp.float32)
    o_ref[...] = acc.astype(o_ref.dtype)


def _choose_tile_hw(HW, target=2048):
    """Pick a lane-dense spatial tile T. Returns (T, HW_pad)."""
    if HW % 128 == 0:
        # Largest multiple of 128 that divides HW and is <= target.
        best = 128
        t = 128
        limit = min(target, HW)
        while t <= limit:
            if HW % t == 0:
                best = t
            t += 128
        return best, HW
    if HW <= target:
        # Small ragged spatial extent: one full-width block (allowed since the
        # block equals the full array dim).
        return HW, HW
    # Ragged and large: pad H*W up to a multiple of the target tile.
    HW_pad = pl.cdiv(HW, target) * target
    return target, HW_pad


def fusion_embed(x_A, x_B, weight, *, max_tile_hw=2048):
    """x_A, x_B: (N, C, H, W) NCHW.  weight: (C_out, 2C, 1, 1).  Returns (N, C_out, H, W)."""
    N, C, H, W = x_A.shape
    C_out = weight.shape[0]
    assert weight.shape == (C_out, 2 * C, 1, 1)

    HW = H * W
    tile_hw, HW_pad = _choose_tile_hw(HW, target=max_tile_hw)

    # Pure reshapes (contiguous NCHW), no transpose.
    xa3d = x_A.reshape(N, C, HW)
    xb3d = x_B.reshape(N, C, HW)
    if HW_pad != HW:
        pad = HW_pad - HW
        xa3d = jnp.pad(xa3d, ((0, 0), (0, 0), (0, pad)))
        xb3d = jnp.pad(xb3d, ((0, 0), (0, 0), (0, pad)))

    # Split concat-conv weight: first C input channels act on x_A, next C on x_B.
    w2d = weight.reshape(C_out, 2 * C)
    w_a = w2d[:, :C]          # (C_out, C)
    w_b = w2d[:, C:]          # (C_out, C)

    grid = (N, HW_pad // tile_hw)

    # Explicit VMEM budget: double-buffered input/output tiles + resident weights.
    itemsize = jnp.dtype(x_A.dtype).itemsize
    bytes_per_step = (2 * 2 * C * tile_hw * itemsize       # 2 inputs, double-buffered
                      + 2 * C_out * tile_hw * 4            # output tile (f32 acc upper bound)
                      + 2 * 2 * C_out * C * itemsize)      # weight slabs
    vmem_limit = int(min(64 * 2 ** 20, max(16 * 2 ** 20, 4 * bytes_per_step)))

    out3d = pl.pallas_call(
        _fusion_embed_kernel,
        out_shape=jax.ShapeDtypeStruct((N, C_out, HW_pad), x_A.dtype),
        grid_spec=pltpu.PrefetchScalarGridSpec(
            num_scalar_prefetch=0,
            grid=grid,
            in_specs=[
                # Batch dim squeezed out (None); kernel sees (C, tile_hw).
                pl.BlockSpec((None, C, tile_hw), lambda n, j: (n, 0, j)),   # x_A tile
                pl.BlockSpec((None, C, tile_hw), lambda n, j: (n, 0, j)),   # x_B tile
                pl.BlockSpec((C_out, C), lambda n, j: (0, 0)),              # W_A (whole)
                pl.BlockSpec((C_out, C), lambda n, j: (0, 0)),              # W_B (whole)
            ],
            out_specs=pl.BlockSpec((None, C_out, tile_hw), lambda n, j: (n, 0, j)),
        ),
        compiler_params=pltpu.CompilerParams(
            dimension_semantics=("parallel", "parallel"),
            vmem_limit_bytes=vmem_limit),
    )(xa3d, xb3d, w_a, w_b)

    if HW_pad != HW:
        out3d = out3d[:, :, :HW]
    # (N, C_out, HW) -> (N, C_out, H, W): pure reshape, no transpose.
    return out3d.reshape(N, C_out, H, W)


if __name__ == "__main__":
    # Small shapes consistent with the module: batch=2, embed_dim=4, spatial=16.
    N, C, H, W = 2, 4, 16, 16
    key = jax.random.PRNGKey(0)
    k1, k2, k3 = jax.random.split(key, 3)

    x_A = jax.random.normal(k1, (N, C, H, W), dtype=jnp.float32)
    x_B = jax.random.normal(k2, (N, C, H, W), dtype=jnp.float32)
    # Conv2d(embed_dim*2, embed_dim, kernel_size=1, bias=False) weight: (C, 2C, 1, 1)
    C_out = C
    weight = (jax.random.normal(k3, (C_out, 2 * C, 1, 1), dtype=jnp.float32)
              * (1.0 / jnp.sqrt(2.0 * C)))

    out = fusion_embed(x_A, x_B, weight)
    out = jax.block_until_ready(out)

    # Reference: plain-JAX equivalent of concat + 1x1 conv (no bias).
    x_cat = jnp.concatenate([x_A, x_B], axis=1)                         # (N, 2C, H, W)
    ref = jnp.einsum("nchw,oc->nohw", x_cat, weight.reshape(C_out, 2 * C))
    assert out.shape == (N, C_out, H, W)
    assert jnp.allclose(out, ref, atol=1e-5, rtol=1e-5), "mismatch vs reference"

    print("KERNEL_OK")
</pallas_src>

<mosaic_0001>
module attributes {stable_mosaic.version = 11 : i64} {
  func.func @_fusion_embed_kernel(%arg0: i32, %arg1: i32, %arg2: memref<1x4x256xf32, #tpu.memory_space<vmem>>, %arg3: memref<1x4x256xf32, #tpu.memory_space<vmem>>, %arg4: memref<4x4xf32, #tpu.memory_space<vmem>>, %arg5: memref<4x4xf32, #tpu.memory_space<vmem>>, %arg6: memref<1x4x256xf32, #tpu.memory_space<vmem>>) attributes {dimension_semantics = [#tpu.dimension_semantics<parallel>, #tpu.dimension_semantics<parallel>], iteration_bounds = array<i64: 2, 1>, scalar_prefetch = 0 : i64, scratch_operands = 0 : i64, tpu.core_type = #tpu.core_type<tc>, window_params = [{transform_indices = @transform_0, window_bounds = array<i64: 1, 4, 256>}, {transform_indices = @transform_1, window_bounds = array<i64: 1, 4, 256>}, {pipeline_mode = #tpu.pipeline_mode<synchronous>, transform_indices = @transform_2, window_bounds = array<i64: 4, 4>}, {pipeline_mode = #tpu.pipeline_mode<synchronous>, transform_indices = @transform_3, window_bounds = array<i64: 4, 4>}, {transform_indices = @transform_4, window_bounds = array<i64: 1, 4, 256>}]} {
    %c0 = arith.constant 0 : index
    %c0_0 = arith.constant 0 : index
    %0 = vector.load %arg4[%c0, %c0_0] : memref<4x4xf32, #tpu.memory_space<vmem>>, vector<4x4xf32>
    %c0_1 = arith.constant 0 : index
    %c0_2 = arith.constant 0 : index
    %c0_3 = arith.constant 0 : index
    %1 = vector.load %arg2[%c0_1, %c0_2, %c0_3] : memref<1x4x256xf32, #tpu.memory_space<vmem>>, vector<1x4x256xf32>
    %2 = vector.shape_cast %1 : vector<1x4x256xf32> to vector<4x256xf32>
    %cst = arith.constant dense<0.000000e+00> : vector<4x256xf32>
    %3 = tpu.matmul %0, %2, %cst {dimension_numbers = #tpu.dot_dimension_numbers<[1], [0], [0], [1], [0, 0, 1, 1], [], []>} : vector<4x4xf32>, vector<4x256xf32>, vector<4x256xf32> -> vector<4x256xf32>
    %c0_4 = arith.constant 0 : index
    %c0_5 = arith.constant 0 : index
    %4 = vector.load %arg5[%c0_4, %c0_5] : memref<4x4xf32, #tpu.memory_space<vmem>>, vector<4x4xf32>
    %c0_6 = arith.constant 0 : index
    %c0_7 = arith.constant 0 : index
    %c0_8 = arith.constant 0 : index
    %5 = vector.load %arg3[%c0_6, %c0_7, %c0_8] : memref<1x4x256xf32, #tpu.memory_space<vmem>>, vector<1x4x256xf32>
    %6 = vector.shape_cast %5 : vector<1x4x256xf32> to vector<4x256xf32>
    %cst_9 = arith.constant dense<0.000000e+00> : vector<4x256xf32>
    %7 = tpu.matmul %4, %6, %cst_9 {dimension_numbers = #tpu.dot_dimension_numbers<[1], [0], [0], [1], [0, 0, 1, 1], [], []>} : vector<4x4xf32>, vector<4x256xf32>, vector<4x256xf32> -> vector<4x256xf32>
    %8 = arith.addf %3, %7 : vector<4x256xf32>
    %c0_10 = arith.constant 0 : index
    %c0_11 = arith.constant 0 : index
    %c0_12 = arith.constant 0 : index
    %9 = vector.load %arg6[%c0_10, %c0_11, %c0_12] : memref<1x4x256xf32, #tpu.memory_space<vmem>>, vector<1x4x256xf32>
    %10 = vector.shape_cast %9 : vector<1x4x256xf32> to vector<4x256xf32>
    %11 = vector.shape_cast %8 : vector<4x256xf32> to vector<1x4x256xf32>
    tpu.vector_store %arg6[%c0_10, %c0_11, %c0_12], %11 {strides = array<i32>} : memref<1x4x256xf32, #tpu.memory_space<vmem>>, vector<1x4x256xf32>,
    return
  }
  func.func @transform_0(%arg0: i32, %arg1: i32) -> (i32, i32, i32) {
    %c0_i32 = arith.constant 0 : i32
    %c0_i32_0 = arith.constant 0 : i32
    return %arg0, %c0_i32, %arg1 : i32, i32, i32
  }
  func.func @transform_1(%arg0: i32, %arg1: i32) -> (i32, i32, i32) {
    %c0_i32 = arith.constant 0 : i32
    %c0_i32_0 = arith.constant 0 : i32
    return %arg0, %c0_i32, %arg1 : i32, i32, i32
  }
  func.func @transform_2(%arg0: i32, %arg1: i32) -> (i32, i32) {
    %c0_i32 = arith.constant 0 : i32
    %c0_i32_0 = arith.constant 0 : i32
    %c0_i32_1 = arith.constant 0 : i32
    return %c0_i32, %c0_i32_0 : i32, i32
  }
  func.func @transform_3(%arg0: i32, %arg1: i32) -> (i32, i32) {
    %c0_i32 = arith.constant 0 : i32
    %c0_i32_0 = arith.constant 0 : i32
    %c0_i32_1 = arith.constant 0 : i32
    return %c0_i32, %c0_i32_0 : i32, i32
  }
  func.func @transform_4(%arg0: i32, %arg1: i32) -> (i32, i32, i32) {
    %c0_i32 = arith.constant 0 : i32
    %c0_i32_0 = arith.constant 0 : i32
    return %arg0, %c0_i32, %arg1 : i32, i32, i32
  }
}

</mosaic_0001>

<llo_original>
// kernel: tpu_custom_call.1
$region0: #{tpu_custom_call.1}
  #allocation0 [shape = 'u32[]', space=smem, size = 0x4, offset = 0x4, fixed_abs, tag = 'smem constant byte address 0x4 - core index']
  #allocation1 [shape = 'u32[72,128]{1,0:T(1,128)}', space=vmem, size = 0x9000, scoped, tag = 'internal scratch']
  %s0 = inlined_call_operand.hbm [shape: f32[2,4,256], index: 0, kind: input, shape index: {}]
  %s1 = inlined_call_operand.hbm [shape: f32[2,4,256], index: 1, kind: input, shape index: {}]
  %s2 = inlined_call_operand.hbm [shape: f32[4,4], index: 2, kind: input, shape index: {}]
  %s3 = inlined_call_operand.hbm [shape: f32[4,4], index: 3, kind: input, shape index: {}]
  %s4 = inlined_call_operand.hbm [shape: f32[2,4,256], index: 4, kind: output, shape index: {}]
  %s5 = sld [smem:[#allocation0]]
  $region65: #{tpu_custom_call.1} parent=0
    _
  %s7 = ssub.s32 1, %s5
  %s8 = scalar_select 0, %s7, %s5
  $region1: #{tpu_custom_call.1} parent=0
    #allocation2 [shape = 'u8[8192]{0}', space=vmem, size = 0x2000, scoped, tag = 'input window, operand 0']
    #allocation3 [shape = 's32[2]{0}', space=sflag, size = 0x8, scoped, tag = 'scoped memory for tpu_custom_call.1']
    #allocation4 [shape = 's32[2]{0}', space=sflag, size = 0x8, scoped, tag = 'scoped memory for tpu_custom_call.1']
    #allocation5 [shape = 'u8[8192]{0}', space=vmem, size = 0x2000, scoped, tag = 'input window, operand 1']
    #allocation6 [shape = 's32[2]{0}', space=sflag, size = 0x8, scoped, tag = 'scoped memory for tpu_custom_call.1']
    #allocation7 [shape = 'u8[2048]{0}', space=vmem, size = 0x800, scoped, tag = 'input window, operand 2, single buffered']
    #allocation8 [shape = 'u8[2048]{0}', space=vmem, size = 0x800, scoped, tag = 'input window, operand 3, single buffered']
    #allocation9 [shape = 's32[1]{0}', space=sflag, size = 0x4, scoped, tag = 'scoped memory for tpu_custom_call.1']
    #allocation10 [shape = 'u8[8192]{0}', space=vmem, size = 0x2000, scoped, tag = 'output window, operand 0']
    %9 = vsyncpa [#allocation3], 0
    %s10 = scalar_lea.sflag [#allocation3], 1
    %11 = vsyncpa %s10, 0
    %12 = vsyncpa [#allocation6], 0
    %s13 = scalar_lea.sflag [#allocation6], 1
    %14 = vsyncpa %s13, 0
    %15 = vsyncpa [#allocation9], 0
    %16 = vsyncpa [#allocation4], 0
    %s17 = scalar_lea.sflag [#allocation4], 1
    %18 = vsyncpa %s17, 0
    loop: start=0, step=1, limit=4
    $region2: #{tpu_custom_call.1} parent=1 // loop_pre_header
      _
    $region3: #{tpu_custom_call.1} parent=1 // loop_header
      %s20 = sphi 0, %s24
      %p21 = scmp.ge.s32.totalorder %s20, 4
      %s27 = sphi 0, %s39
      %s28 = sphi 0, %s35
      %s29 = sphi 0, %s27
      %s30 = sphi 0, %s28
      %s31 = sphi 0, %s29
      %s32 = sphi 0, %s30
      %s44 = sphi 0, %s46
      %s47 = sphi 0, %s44
      %s48 = sphi 0, %s47
      %s64 = sphi 0, %s48
      %s72 = sphi 0, %s74
      %s75 = sphi 0, %s72
      %s76 = sphi 0, %s75
      %s92 = sphi 0, %s76
      %s96 = sphi 0, %s96
      %s98 = sphi 0, %s96
      %s99 = sphi 0, %s98
      %s113 = sphi 0, %s99
      %s117 = sphi 0, %s117
      %s119 = sphi 0, %s117
      %s120 = sphi 0, %s119
      %s134 = sphi 0, %s120
      %s142 = sphi 0, %s144
      %s145 = sphi 0, %s142
      %s146 = sphi 0, %s145
      %s162 = sphi 0, %s146
    $region4: #{tpu_custom_call.1} parent=1 // loop_header_branch
      %23 = sbr.rel (%p21) target = $region8
    $region5: #{tpu_custom_call.1} parent=1 // loop_body
      %s25 = ssub.s32 %s20, 1
      %s26 = ssub.s32 %s20, 2
      %s33 = sadd.s32 1, %s28
      %p34 = scmp.ge.s32.totalorder %s33, 1
      %s35 = scalar_select %p34, 0, %s33
      %s36 = sadd.s32 1, %s27
      %s37 = scalar_select %p34, %s36, %s27
      %p38 = scmp.ge.s32.totalorder %s37, 2
      %s39 = scalar_select %p38, 0, %s37
      %s40 = ssub.s32 %s27, %s39
      %s41 = ssub.s32 %s28, %s35
      %s42 = sor.u32 %s40, %s41
      %p43 = scmp.eq.s32.totalorder %s42, 0
      %s45 = sadd.s32 %s44, 1
      %s46 = scalar_select %p43, %s44, %s45
      %p49 = pneg %p43
      %p50 = scmp.eq.s32.totalorder %s20, 1
      %p51 = por %p49, %p50
      %p52 = scmp.ne.s32.totalorder %s44, %s47
      %p53 = scmp.eq.s32.totalorder %s20, 0
      %p54 = por %p52, %p53
      %p55 = scmp.ne.s32.totalorder %s44, %s47
      %p56 = scmp.eq.s32.totalorder %s25, 1
      %p57 = por %p55, %p56
      %p58 = scmp.ne.s32.totalorder %s47, %s48
      %p59 = scmp.eq.s32.totalorder %s25, 0
      %p60 = por %p58, %p59
      %p61 = scmp.ne.s32.totalorder %s47, %s48
      %p62 = scmp.eq.s32.totalorder %s26, 1
      %p63 = por %p61, %p62
      %p65 = scmp.ne.s32.totalorder %s48, %s64
      %p66 = scmp.eq.s32.totalorder %s26, 0
      %p67 = por %p65, %p66
      %s68 = ssub.s32 %s27, %s39
      %s69 = ssub.s32 %s28, %s35
      %s70 = sor.u32 %s68, %s69
      %p71 = scmp.eq.s32.totalorder %s70, 0
      %s73 = sadd.s32 %s72, 1
      %s74 = scalar_select %p71, %s72, %s73
      %p77 = pneg %p71
      %p78 = scmp.eq.s32.totalorder %s20, 1
      %p79 = por %p77, %p78
      %p80 = scmp.ne.s32.totalorder %s72, %s75
      %p81 = scmp.eq.s32.totalorder %s20, 0
      %p82 = por %p80, %p81
      %p83 = scmp.ne.s32.totalorder %s72, %s75
      %p84 = scmp.eq.s32.totalorder %s25, 1
      %p85 = por %p83, %p84
      %p86 = scmp.ne.s32.totalorder %s75, %s76
      %p87 = scmp.eq.s32.totalorder %s25, 0
      %p88 = por %p86, %p87
      %p89 = scmp.ne.s32.totalorder %s75, %s76
      %p90 = scmp.eq.s32.totalorder %s26, 1
      %p91 = por %p89, %p90
      %p93 = scmp.ne.s32.totalorder %s76, %s92
      %p94 = scmp.eq.s32.totalorder %s26, 0
      %p95 = por %p93, %p94
      %s97 = sadd.s32 %s96, 1
      %p100 = scmp.eq.s32.totalorder %s20, 1
      %p101 = scmp.ne.s32.totalorder %s96, %s98
      %p102 = scmp.eq.s32.totalorder %s20, 0
      %p103 = por %p101, %p102
      %p104 = scmp.ne.s32.totalorder %s96, %s98
      %p105 = scmp.eq.s32.totalorder %s25, 1
      %p106 = por %p104, %p105
      %p107 = scmp.ne.s32.totalorder %s98, %s99
      %p108 = scmp.eq.s32.totalorder %s25, 0
      %p109 = por %p107, %p108
      %p110 = scmp.ne.s32.totalorder %s98, %s99
      %p111 = scmp.eq.s32.totalorder %s26, 1
      %p112 = por %p110, %p111
      %p114 = scmp.ne.s32.totalorder %s99, %s113
      %p115 = scmp.eq.s32.totalorder %s26, 0
      %p116 = por %p114, %p115
      %s118 = sadd.s32 %s117, 1
      %p121 = scmp.eq.s32.totalorder %s20, 1
      %p122 = scmp.ne.s32.totalorder %s117, %s119
      %p123 = scmp.eq.s32.totalorder %s20, 0
      %p124 = por %p122, %p123
      %p125 = scmp.ne.s32.totalorder %s117, %s119
      %p126 = scmp.eq.s32.totalorder %s25, 1
      %p127 = por %p125, %p126
      %p128 = scmp.ne.s32.totalorder %s119, %s120
      %p129 = scmp.eq.s32.totalorder %s25, 0
      %p130 = por %p128, %p129
      %p131 = scmp.ne.s32.totalorder %s119, %s120
      %p132 = scmp.eq.s32.totalorder %s26, 1
      %p133 = por %p131, %p132
      %p135 = scmp.ne.s32.totalorder %s120, %s134
      %p136 = scmp.eq.s32.totalorder %s26, 0
      %p137 = por %p135, %p136
      %s138 = ssub.s32 %s27, %s39
      %s139 = ssub.s32 %s28, %s35
      %s140 = sor.u32 %s138, %s139
      %p141 = scmp.eq.s32.totalorder %s140, 0
      %s143 = sadd.s32 %s142, 1
      %s144 = scalar_select %p141, %s142, %s143
      %p147 = pneg %p141
      %p148 = scmp.eq.s32.totalorder %s20, 1
      %p149 = por %p147, %p148
      %p150 = scmp.ne.s32.totalorder %s142, %s145
      %p151 = scmp.eq.s32.totalorder %s20, 0
      %p152 = por %p150, %p151
      %p153 = scmp.ne.s32.totalorder %s142, %s145
      %p154 = scmp.eq.s32.totalorder %s25, 1
      %p155 = por %p153, %p154
      %p156 = scmp.ne.s32.totalorder %s145, %s146
      %p157 = scmp.eq.s32.totalorder %s25, 0
      %p158 = por %p156, %p157
      %p159 = scmp.ne.s32.totalorder %s145, %s146
      %p160 = scmp.eq.s32.totalorder %s26, 1
      %p161 = por %p159, %p160
      %p163 = scmp.ne.s32.totalorder %s146, %s162
      %p164 = scmp.eq.s32.totalorder %s26, 0
      %p165 = por %p163, %p164
      %p166 = scmp.le.s32.totalorder 1, %s20
      %p167 = scmp.lt.s32.totalorder %s20, 3
      %p168 = pnand %p166, %p167
      %p169 = pneg %p168
      // Predicated region
      $region9: #{tpu_custom_call.1} parent=5 // pred_check
        _
      $region10: #{tpu_custom_call.1} parent=5 // pred_check_branch
        %171 = sbr.rel (%p168) target = $region12
      $region11: #{tpu_custom_call.1} parent=5 // pred_region
        %s172 = ssub.s32 %s20, 1
        // Predicated region
        $region13: #{tpu_custom_call.1} parent=11 // pred_check
          %p173 = pneg %p109
        $region14: #{tpu_custom_call.1} parent=11 // pred_check_branch
          %175 = sbr.rel (%p173) target = $region16
        $region15: #{tpu_custom_call.1} parent=11 // pred_region
          %177 = vsyncadd [#allocation6], 0
          %s179 = sshll.u32 %s2, 4
          %s180 = int_to_ptr.hbm [resolvable:$true] %s179
          %s181 = sshll.u32 [#allocation7], 4
          %s182 = int_to_ptr.vmem [resolvable:$true] %s181
          %184 = dma.hbm_to_vmem [thread:$0]  %s180, 64, %s182, [#allocation6]
        $region16: #{tpu_custom_call.1} parent=11 // pred_fallthru
          _
        // Predicated region
        $region17: #{tpu_custom_call.1} parent=11 // pred_check
          %p185 = pneg %p130
        $region18: #{tpu_custom_call.1} parent=11 // pred_check_branch
          %187 = sbr.rel (%p185) target = $region20
        $region19: #{tpu_custom_call.1} parent=11 // pred_region
          %189 = vsyncadd [#allocation9], 0
          %s191 = sshll.u32 %s3, 4
          %s192 = int_to_ptr.hbm [resolvable:$true] %s191
          %s193 = sshll.u32 [#allocation8], 4
          %s194 = int_to_ptr.vmem [resolvable:$true] %s193
          %196 = dma.hbm_to_vmem [thread:$0]  %s192, 64, %s194, [#allocation9]
        $region20: #{tpu_custom_call.1} parent=11 // pred_fallthru
          _
      $region12: #{tpu_custom_call.1} parent=5 // pred_fallthru
        _
      %p197 = scmp.lt.s32.totalorder %s20, 2
      // Predicated region
      $region21: #{tpu_custom_call.1} parent=5 // pred_check
        %p198 = pneg %p197
      $region22: #{tpu_custom_call.1} parent=5 // pred_check_branch
        %200 = sbr.rel (%p198) target = $region24
      $region23: #{tpu_custom_call.1} parent=5 // pred_region
        // Predicated region
        $region25: #{tpu_custom_call.1} parent=23 // pred_check
          %p201 = pneg %p54
        $region26: #{tpu_custom_call.1} parent=23 // pred_check_branch
          %203 = sbr.rel (%p201) target = $region28
        $region27: #{tpu_custom_call.1} parent=23 // pred_region
          %s204 = sand.u32 %s44, 1
          %s205 = scalar_lea.sflag [#allocation3], %s204
          %s206 = sand.u32 %s44, 1
          %s207 = smul.addr %s206, 8
          %s208 = scalar_lea.vmem [#allocation2], %s207
          %s209 = smul.u32 2, %s28
          %211 = vsyncadd %s205, 0
          %s212 = smul.addr %s27, 2
          %s213 = sadd.s32 %s209, %s212
          %s214 = smul.addr %s213, 4
          %s215 = scalar_lea.hbm %s0, %s214
          %s217 = sshll.u32 %s215, 4
          %s218 = int_to_ptr.hbm [resolvable:$true] %s217
          %s219 = sshll.u32 %s208, 4
          %s220 = int_to_ptr.vmem [resolvable:$true] %s219
          %222 = dma.hbm_to_vmem [thread:$0]  %s218, 128, %s220, %s205
        $region28: #{tpu_custom_call.1} parent=23 // pred_fallthru
          _
        // Predicated region
        $region29: #{tpu_custom_call.1} parent=23 // pred_check
          %p223 = pneg %p82
        $region30: #{tpu_custom_call.1} parent=23 // pred_check_branch
          %225 = sbr.rel (%p223) target = $region32
        $region31: #{tpu_custom_call.1} parent=23 // pred_region
          %s226 = sand.u32 %s20, 1
          %s227 = scalar_lea.sflag [#allocation6], %s226
          %s228 = sand.u32 %s72, 1
          %s229 = smul.addr %s228, 8
          %s230 = scalar_lea.vmem [#allocation5], %s229
          %s231 = smul.u32 2, %s28
          %233 = vsyncadd %s227, 0
          %s234 = smul.addr %s27, 2
          %s235 = sadd.s32 %s231, %s234
          %s236 = smul.addr %s235, 4
          %s237 = scalar_lea.hbm %s1, %s236
          %s239 = sshll.u32 %s237, 4
          %s240 = int_to_ptr.hbm [resolvable:$true] %s239
          %s241 = sshll.u32 %s230, 4
          %s242 = int_to_ptr.vmem [resolvable:$true] %s241
          %244 = dma.hbm_to_vmem [thread:$0]  %s240, 128, %s242, %s227
        $region32: #{tpu_custom_call.1} parent=23 // pred_fallthru
          _
      $region24: #{tpu_custom_call.1} parent=5 // pred_fallthru
        _
      %p245 = scmp.le.s32.totalorder 1, %s20
      %p246 = scmp.lt.s32.totalorder %s20, 3
      %p247 = pnand %p245, %p246
      %p248 = pneg %p247
      // Predicated region
      $region33: #{tpu_custom_call.1} parent=5 // pred_check
        _
      $region34: #{tpu_custom_call.1} parent=5 // pred_check_branch
        %250 = sbr.rel (%p247) target = $region36
      $region35: #{tpu_custom_call.1} parent=5 // pred_region
        %s251 = ssub.s32 %s20, 1
        %s252 = sand.u32 %s47, 1
        %s253 = scalar_lea.sflag [#allocation3], %s252
        %s254 = sand.u32 %s47, 1
        %s255 = smul.addr %s254, 8
        %s256 = scalar_lea.vmem [#allocation2], %s255
        // Predicated region
        $region37: #{tpu_custom_call.1} parent=35 // pred_check
          %p257 = pneg %p60
        $region38: #{tpu_custom_call.1} parent=35 // pred_check_branch
          %259 = sbr.rel (%p257) target = $region40
        $region39: #{tpu_custom_call.1} parent=35 // pred_region
          %261 = dma.done %s253, 128
        $region40: #{tpu_custom_call.1} parent=35 // pred_fallthru
          _
        %s262 = sand.u32 %s25, 1
        %s263 = scalar_lea.sflag [#allocation6], %s262
        %s264 = sand.u32 %s75, 1
        %s265 = smul.addr %s264, 8
        %s266 = scalar_lea.vmem [#allocation5], %s265
        // Predicated region
        $region41: #{tpu_custom_call.1} parent=35 // pred_check
          %p267 = pneg %p88
        $region42: #{tpu_custom_call.1} parent=35 // pred_check_branch
          %269 = sbr.rel (%p267) target = $region44
        $region43: #{tpu_custom_call.1} parent=35 // pred_region
          %271 = dma.done %s263, 128
        $region44: #{tpu_custom_call.1} parent=35 // pred_fallthru
          _
        // Predicated region
        $region45: #{tpu_custom_call.1} parent=35 // pred_check
          %p272 = pneg %p109
        $region46: #{tpu_custom_call.1} parent=35 // pred_check_branch
          %274 = sbr.rel (%p272) target = $region48
        $region47: #{tpu_custom_call.1} parent=35 // pred_region
          %276 = dma.done [#allocation6], 64
        $region48: #{tpu_custom_call.1} parent=35 // pred_fallthru
          _
        // Predicated region
        $region49: #{tpu_custom_call.1} parent=35 // pred_check
          %p277 = pneg %p130
        $region50: #{tpu_custom_call.1} parent=35 // pred_check_branch
          %279 = sbr.rel (%p277) target = $region52
        $region51: #{tpu_custom_call.1} parent=35 // pred_region
          %281 = dma.done [#allocation9], 64
        $region52: #{tpu_custom_call.1} parent=35 // pred_fallthru
          _
        %s282 = sand.u32 %s47, 1
        %s283 = scalar_lea.sflag [#allocation3], %s282
        %s284 = sand.u32 %s47, 1
        %s285 = smul.addr %s284, 8
        %s286 = scalar_lea.vmem [#allocation2], %s285
        %p287 = pneg %p60
        %p288 = pneg %p57
        %s289 = sand.u32 %s25, 1
        %s290 = scalar_lea.sflag [#allocation6], %s289
        %s291 = sand.u32 %s75, 1
        %s292 = smul.addr %s291, 8
        %s293 = scalar_lea.vmem [#allocation5], %s292
        %p294 = pneg %p88
        %p295 = pneg %p85
        %p296 = pneg %p109
        %p297 = pneg %p106
        %p298 = pneg %p130
        %p299 = pneg %p127
        %p300 = pneg %p158
        %p301 = pneg %p155
        %s302 = sand.u32 %s145, 1
        %s303 = scalar_lea.sflag [#allocation4], %s302
        %s304 = sand.u32 %s145, 1
        %s305 = smul.addr %s304, 8
        %s306 = scalar_lea.vmem [#allocation10], %s305
        %s307 = smul.u32 2, %s30
        %s308 = smul.u32 2, %s30
        %s309 = smul.u32 2, %s30
        %v310 = vld [vmem:[#allocation7] sm:$0xf]
        %v311 = vld [vmem:[%s256] sm:$0xff]
        %v312 = vld [vmem:[#allocation8] sm:$0xf]
        %v313 = vld [vmem:[%s266] sm:$0xff]
        %315 = vst [vmem:[#allocation1] ss:$2 sm:$0xff] %v313
        %v316 = vld.sshfl [vmem:[#allocation1] sm:$0xff pattern:$0x75316420]
        %v317 = vld.sshfl [vmem:[#allocation1 + $0x8] sm:$0xff pattern:$0x75316420]
        %vm318 = vcmask 31744
        %v320 = vsel %vm318, %v312, 0
        %vm322 = vcmask 1043456
        %v323 = vsel %vm322, %v316, 0
        %v325 = vsel %vm322, %v317, 0
        %327 = vmatpush.msra.mxu0 0.0
        %328 = vmatpush.msra.mxu0 0.0
        %329 = vmatpush.msra.mxu0 0.0
        %330 = vmatpush.msra.mxu0 0.0
        %331 = vmatpush.msra.mxu0 0.0
        %332 = vmatpush.msra.mxu0 0.0
        %333 = vmatpush.msra.mxu0 0.0
        %334 = vmatpush.msra.mxu0 0.0
        %335 = vmatpush.msra.mxu0 0.0
        %336 = vmatpush.msra.mxu0 0.0
        %337 = vmatpush.msra.mxu0 0.0
        %338 = vmatpush.msra.mxu0 0.0
        %339 = vmatpush.msra.mxu0 0.0
        %340 = vmatpush.msra.mxu0 0.0
        %341 = vmatpush.msra.mxu0 0.0
        %342 = vmatpush.msra.mxu0 %v323
        %343 = vmatmul.f32.gmra.mxu0 %v320
        %v344 = vpop.f32.mrf.mxu0
        %v345 = vadd.f32 0.0, %v344
        %346 = vdwg.mxu0
        %347 = vmatpush.msra.mxu0 0.0
        %348 = vmatpush.msra.mxu0 0.0
        %349 = vmatpush.msra.mxu0 0.0
        %350 = vmatpush.msra.mxu0 0.0
        %351 = vmatpush.msra.mxu0 0.0
        %352 = vmatpush.msra.mxu0 0.0
        %353 = vmatpush.msra.mxu0 0.0
        %354 = vmatpush.msra.mxu0 0.0
        %355 = vmatpush.msra.mxu0 0.0
        %356 = vmatpush.msra.mxu0 0.0
        %357 = vmatpush.msra.mxu0 0.0
        %358 = vmatpush.msra.mxu0 0.0
        %359 = vmatpush.msra.mxu0 0.0
        %360 = vmatpush.msra.mxu0 0.0
        %361 = vmatpush.msra.mxu0 0.0
        %362 = vmatpush.msra.mxu0 %v325
        %363 = vmatmul.f32.gmra.mxu0 %v320
        %v364 = vpop.f32.mrf.mxu0
        %v365 = vadd.f32 0.0, %v364
        %366 = vdwg.mxu0
        %368 = vst [vmem:[#allocation1] ss:$2 sm:$0xff] %v311
        %v369 = vld.sshfl [vmem:[#allocation1] sm:$0xff pattern:$0x75316420]
        %v370 = vld.sshfl [vmem:[#allocation1 + $0x8] sm:$0xff pattern:$0x75316420]
        %v372 = vsel %vm318, %v310, 0
        %v374 = vsel %vm322, %v369, 0
        %v376 = vsel %vm322, %v370, 0
        %378 = vmatpush.msra.mxu0 0.0
        %379 = vmatpush.msra.mxu0 0.0
        %380 = vmatpush.msra.mxu0 0.0
        %381 = vmatpush.msra.mxu0 0.0
        %382 = vmatpush.msra.mxu0 0.0
        %383 = vmatpush.msra.mxu0 0.0
        %384 = vmatpush.msra.mxu0 0.0
        %385 = vmatpush.msra.mxu0 0.0
        %386 = vmatpush.msra.mxu0 0.0
        %387 = vmatpush.msra.mxu0 0.0
        %388 = vmatpush.msra.mxu0 0.0
        %389 = vmatpush.msra.mxu0 0.0
        %390 = vmatpush.msra.mxu0 0.0
        %391 = vmatpush.msra.mxu0 0.0
        %392 = vmatpush.msra.mxu0 0.0
        %393 = vmatpush.msra.mxu0 %v374
        %394 = vmatmul.f32.gmra.mxu0 %v372
        %v395 = vpop.f32.mrf.mxu0
        %v396 = vadd.f32 %v345, %v395
        %397 = vdwg.mxu0
        %398 = vmatpush.msra.mxu0 0.0
        %399 = vmatpush.msra.mxu0 0.0
        %400 = vmatpush.msra.mxu0 0.0
        %401 = vmatpush.msra.mxu0 0.0
        %402 = vmatpush.msra.mxu0 0.0
        %403 = vmatpush.msra.mxu0 0.0
        %404 = vmatpush.msra.mxu0 0.0
        %405 = vmatpush.msra.mxu0 0.0
        %406 = vmatpush.msra.mxu0 0.0
        %407 = vmatpush.msra.mxu0 0.0
        %408 = vmatpush.msra.mxu0 0.0
        %409 = vmatpush.msra.mxu0 0.0
        %410 = vmatpush.msra.mxu0 0.0
        %411 = vmatpush.msra.mxu0 0.0
        %412 = vmatpush.msra.mxu0 0.0
        %413 = vmatpush.msra.mxu0 %v376
        %414 = vmatmul.f32.gmra.mxu0 %v372
        %v415 = vpop.f32.mrf.mxu0
        %v416 = vadd.f32 %v365, %v415
        %417 = vdwg.mxu0
        %v420 = vrot.slane %v416, 4
        %v421 = vsel %vm322, %v396, %v420
        %423 = vst [vmem:[%s306] sm:$0xff] %v421
        %s424 = sand.u32 %s145, 1
        %s425 = scalar_lea.sflag [#allocation4], %s424
        %s426 = sand.u32 %s145, 1
        %s427 = smul.addr %s426, 8
        %s428 = scalar_lea.vmem [#allocation10], %s427
        // Predicated region
        $region53: #{tpu_custom_call.1} parent=35 // pred_check
          %p429 = pneg %p155
        $region54: #{tpu_custom_call.1} parent=35 // pred_check_branch
          %431 = sbr.rel (%p429) target = $region56
        $region55: #{tpu_custom_call.1} parent=35 // pred_region
          %s432 = smul.u32 2, %s30
          %434 = vsyncadd %s425, 0
          %s435 = smul.addr %s29, 2
          %s436 = sadd.s32 %s432, %s435
          %s437 = smul.addr %s436, 4
          %s438 = scalar_lea.hbm %s4, %s437
          %s440 = sshll.u32 %s428, 4
          %s441 = int_to_ptr.vmem [resolvable:$true] %s440
          %s442 = sshll.u32 %s438, 4
          %s443 = int_to_ptr.hbm [resolvable:$true] %s442
          %445 = dma.vmem_to_hbm [thread:$0]  %s441, 128, %s443, %s425
        $region56: #{tpu_custom_call.1} parent=35 // pred_fallthru
          _
      $region36: #{tpu_custom_call.1} parent=5 // pred_fallthru
        _
      %p446 = scmp.le.s32.totalorder 2, %s20
      // Predicated region
      $region57: #{tpu_custom_call.1} parent=5 // pred_check
        %p447 = pneg %p446
      $region58: #{tpu_custom_call.1} parent=5 // pred_check_branch
        %449 = sbr.rel (%p447) target = $region60
      $region59: #{tpu_custom_call.1} parent=5 // pred_region
        %s450 = ssub.s32 %s20, 2
        // Predicated region
        $region61: #{tpu_custom_call.1} parent=59 // pred_check
          %p451 = pneg %p161
        $region62: #{tpu_custom_call.1} parent=59 // pred_check_branch
          %453 = sbr.rel (%p451) target = $region64
        $region63: #{tpu_custom_call.1} parent=59 // pred_region
          %s454 = sand.u32 %s146, 1
          %s455 = scalar_lea.sflag [#allocation4], %s454
          %s456 = sand.u32 %s146, 1
          %s457 = smul.addr %s456, 8
          %s458 = scalar_lea.vmem [#allocation10], %s457
          %460 = dma.done %s455, 128
        $region64: #{tpu_custom_call.1} parent=59 // pred_fallthru
          _
      $region60: #{tpu_custom_call.1} parent=5 // pred_fallthru
        _
    $region6: #{tpu_custom_call.1} parent=1 // loop_footer
      %s24 = sadd.s32 1, %s20
    $region7: #{tpu_custom_call.1} parent=1 // loop_footer_branch
      %19 = sbr.rel target = $region3
    $region8: #{tpu_custom_call.1} parent=1 // loop_exit
      _
    %461 = vsyncpa [#allocation3], 1
    %s462 = scalar_lea.sflag [#allocation3], 1
    %463 = vsyncpa %s462, 1
    %464 = vsyncpa [#allocation6], 1
    %s465 = scalar_lea.sflag [#allocation6], 1
    %466 = vsyncpa %s465, 1
    %467 = vsyncpa [#allocation9], 1
    %468 = vsyncpa [#allocation4], 1
    %s469 = scalar_lea.sflag [#allocation4], 1
    %470 = vsyncpa %s469, 1

</llo_original>
